<compile_context>
chip_gen: v7x
topology: tpu7x:2x2x1
jax: 0.10.0
libtpu: 0.0.40
codegen_flags: <defaults>
</compile_context>

<pallas_src>
import functools

import jax
import jax.numpy as jnp
from jax.experimental import pallas as pl
from jax.experimental.pallas import tpu as pltpu


def _dwsc_kernel(x_ref, dwt_ref, pwt_ref, o_ref, *,
                 kh, kw, stride, w_pad, l_flat, c_in, c_out, bn):
    # x_ref  : (bn*C_in, H_pad*W_pad)  VMEM, flat spatial on the lane axis
    # dwt_ref: (bn*C_in, kh*kw + 1)    VMEM, per-row depthwise [weights | bias]
    # pwt_ref: (C_out,  C_in + 1)      VMEM, pointwise [weights | bias]
    # o_ref  : (bn*C_out, L_out)       VMEM, flat "over-wide" output rows
    n_taps = kh * kw
    x = x_ref[...].astype(jnp.float32)
    dwt = dwt_ref[...].astype(jnp.float32)

    if stride == 1:
        def tap(base):
            return x[:, base:base + l_flat]
    else:
        # Deinterleave each residue class once so taps become stride-1 slices
        # of the compacted rows (stride gathers instead of kh*kw strided ones).
        # TODO(synk): untested path in this demo (module default stride=1).
        ys = [x[:, r::stride] for r in range(stride)]

        def tap(base):
            m = base // stride
            return ys[base % stride][:, m:m + l_flat]

    # ---- depthwise kxk conv: lane-shifted taps * per-row weight column ----
    acc = tap(0) * dwt[:, 0:1]                           # init from 1st term
    for t in range(1, n_taps):
        ki, kj = divmod(t, kw)
        acc = acc + tap(ki * w_pad + kj) * dwt[:, t:t + 1]
    dw = jnp.maximum(acc + dwt[:, n_taps:n_taps + 1], 0.0)   # (bn*C_in, L)

    # ---- pointwise 1x1 conv + bias + ReLU: one MXU dot per image ----
    pwt = pwt_ref[...].astype(jnp.float32)
    pww = pwt[:, :c_in]                                   # (C_out, C_in)
    pwb = pwt[:, c_in:c_in + 1]                           # (C_out, 1)
    for b in range(bn):
        out = jnp.dot(pww, dw[b * c_in:(b + 1) * c_in, :],
                      preferred_element_type=jnp.float32)
        out = jnp.maximum(out + pwb, 0.0)
        o_ref[b * c_out:(b + 1) * c_out, :l_flat] = out.astype(o_ref.dtype)
        # lanes >= l_flat of the 128-aligned output block are never read
        # (cropped by the wrapper's slice), so they are left untouched.


def concatanated_conv_dwsc(x_nchw, dw_w, dw_b, pw_w, pw_b,
                           kernel_size=2, stride=1, padding=0):
    """x_nchw: (N, C_in, H, W).  Returns (N, C_out, H_out, W_out) (NCHW)."""
    n, c_in, h, w = x_nchw.shape
    kh = kw = kernel_size
    c_out = pw_w.shape[0]

    x = x_nchw
    if padding > 0:
        # TODO(synk): fold padding into the kernel (element-offset index_map +
        # masked border taps) to avoid this extra HBM pass; module default is 0.
        x = jnp.pad(x, ((0, 0), (0, 0),
                        (padding, padding), (padding, padding)))
    h_pad, w_pad = h + 2 * padding, w + 2 * padding
    h_out = (h_pad - kh) // stride + 1
    w_out = (w_pad - kw) // stride + 1
    hw_pad = h_pad * w_pad
    n_taps = kh * kw
    # flat "over-wide" row: valid lanes are q = oh*W_pad + ow with ow < W_out
    l_flat = (h_out - 1) * w_pad + w_out
    # lane-dense output slab: multiple of 128 and wide enough for the reshape
    l_out = pl.cdiv(h_out * w_pad, 128) * 128

    # free contiguous reshape: (N*C_in) rows on sublanes, flat spatial on lanes
    x_flat = x.reshape(n * c_in, hw_pad)

    # per-row depthwise [weights | bias] table (row r -> channel r % C_in)
    dwt = jnp.concatenate(
        [jnp.asarray(dw_w).reshape(c_in, n_taps),
         jnp.asarray(dw_b).reshape(c_in, 1)], axis=1)
    dwt = jnp.tile(dwt, (n, 1))                           # (N*C_in, taps+1)
    # pointwise [weights | bias] table
    pwt = jnp.concatenate(
        [jnp.asarray(pw_w).reshape(c_out, c_in),
         jnp.asarray(pw_b).reshape(c_out, 1)], axis=1)    # (C_out, C_in+1)

    # images per block: keep block row counts 8-aligned (full sublanes) while
    # exposing as many parallel grid steps as possible (v7x: 2 TensorCores).
    bn = n
    for cand in range(1, n + 1):
        if (n % cand == 0 and (cand * c_in) % 8 == 0
                and (cand * c_out) % 8 == 0):
            bn = cand
            break
    grid = (n // bn,)

    kern = functools.partial(
        _dwsc_kernel, kh=kh, kw=kw, stride=stride, w_pad=w_pad,
        l_flat=l_flat, c_in=c_in, c_out=c_out, bn=bn)

    out_flat = pl.pallas_call(
        kern,
        out_shape=jax.ShapeDtypeStruct((n * c_out, l_out), x.dtype),
        grid_spec=pltpu.PrefetchScalarGridSpec(
            num_scalar_prefetch=0,
            grid=grid,
            in_specs=[
                pl.BlockSpec((bn * c_in, hw_pad), lambda i: (i, 0)),
                pl.BlockSpec((bn * c_in, n_taps + 1), lambda i: (i, 0)),
                pl.BlockSpec((c_out, c_in + 1), lambda i: (0, 0)),
            ],
            out_specs=pl.BlockSpec((bn * c_out, l_out), lambda i: (i, 0)),
        ),
        compiler_params=pltpu.CompilerParams(
            dimension_semantics=("parallel",)),
    )(x_flat, dwt, pwt)

    # pure slice + reshape crop: lanes in [l_flat, h_out*w_pad) all map to the
    # last row's ow >= W_out and are dropped by the final slice.
    out = out_flat[:, :h_out * w_pad].reshape(n, c_out, h_out, w_pad)
    return out[:, :, :, :w_out]                           # NCHW


def _reference(x_nchw, dw_w, dw_b, pw_w, pw_b, kernel_size, stride, padding):
    """Plain-JAX reference (lax conv) for correctness check."""
    c_in = x_nchw.shape[1]
    dn = jax.lax.conv_dimension_numbers(x_nchw.shape, dw_w.shape,
                                        ("NCHW", "OIHW", "NCHW"))
    dw = jax.lax.conv_general_dilated(
        x_nchw, dw_w, window_strides=(stride, stride),
        padding=[(padding, padding), (padding, padding)],
        dimension_numbers=dn, feature_group_count=c_in)
    dw = jax.nn.relu(dw + dw_b[None, :, None, None])
    pw = jax.lax.conv_general_dilated(
        dw, pw_w, window_strides=(1, 1), padding="VALID",
        dimension_numbers=jax.lax.conv_dimension_numbers(
            dw.shape, pw_w.shape, ("NCHW", "OIHW", "NCHW")))
    return jax.nn.relu(pw + pw_b[None, :, None, None])


if __name__ == "__main__":
    key = jax.random.PRNGKey(0)
    batch, in_ch, out_ch, hw = 2, 4, 8, 16
    kernel_size, stride, padding = 2, 1, 0

    k1, k2, k3, k4, k5 = jax.random.split(key, 5)
    x = jax.random.normal(k1, (batch, in_ch, hw, hw), dtype=jnp.float32)
    # depthwise weights: (in_ch, 1, kh, kw); pointwise: (out_ch, in_ch, 1, 1)
    dw_w = jax.random.normal(k2, (in_ch, 1, kernel_size, kernel_size),
                             dtype=jnp.float32) * 0.5
    dw_b = jax.random.normal(k3, (in_ch,), dtype=jnp.float32) * 0.1
    pw_w = jax.random.normal(k4, (out_ch, in_ch, 1, 1), dtype=jnp.float32) * 0.5
    pw_b = jax.random.normal(k5, (out_ch,), dtype=jnp.float32) * 0.1

    out = concatanated_conv_dwsc(x, dw_w, dw_b, pw_w, pw_b,
                                 kernel_size=kernel_size,
                                 stride=stride, padding=padding)
    out = jax.block_until_ready(out)

    ref = _reference(x, dw_w, dw_b, pw_w, pw_b, kernel_size, stride, padding)
    assert out.shape == ref.shape, (out.shape, ref.shape)
    assert jnp.allclose(out, ref, atol=1e-4, rtol=1e-4)

    print("KERNEL_OK")
</pallas_src>

<mosaic_0001>
module attributes {stable_mosaic.version = 11 : i64} {
  func.func @_dwsc_kernel(%arg0: i32, %arg1: memref<8x256xf32, #tpu.memory_space<vmem>>, %arg2: memref<8x5xf32, #tpu.memory_space<vmem>>, %arg3: memref<8x5xf32, #tpu.memory_space<vmem>>, %arg4: memref<16x256xf32, #tpu.memory_space<vmem>>) attributes {dimension_semantics = [#tpu.dimension_semantics<parallel>], iteration_bounds = array<i64: 1>, scalar_prefetch = 0 : i64, scratch_operands = 0 : i64, tpu.core_type = #tpu.core_type<tc>, window_params = [{transform_indices = @transform_0, window_bounds = array<i64: 8, 256>}, {transform_indices = @transform_1, window_bounds = array<i64: 8, 5>}, {pipeline_mode = #tpu.pipeline_mode<synchronous>, transform_indices = @transform_2, window_bounds = array<i64: 8, 5>}, {transform_indices = @transform_3, window_bounds = array<i64: 16, 256>}]} {
    %c0 = arith.constant 0 : index
    %c0_0 = arith.constant 0 : index
    %0 = vector.load %arg1[%c0, %c0_0] : memref<8x256xf32, #tpu.memory_space<vmem>>, vector<8x256xf32>
    %c0_1 = arith.constant 0 : index
    %c0_2 = arith.constant 0 : index
    %1 = vector.load %arg2[%c0_1, %c0_2] : memref<8x5xf32, #tpu.memory_space<vmem>>, vector<8x5xf32>
    %2 = vector.extract_strided_slice %0 {offsets = [0, 0], sizes = [8, 239], strides = [1, 1]} : vector<8x256xf32> to vector<8x239xf32>
    %3 = vector.extract_strided_slice %1 {offsets = [0, 0], sizes = [8, 1], strides = [1, 1]} : vector<8x5xf32> to vector<8x1xf32>
    %4 = vector.broadcast %3 : vector<8x1xf32> to vector<8x239xf32>
    %5 = arith.mulf %2, %4 : vector<8x239xf32>
    %6 = vector.extract_strided_slice %0 {offsets = [0, 1], sizes = [8, 239], strides = [1, 1]} : vector<8x256xf32> to vector<8x239xf32>
    %7 = vector.extract_strided_slice %1 {offsets = [0, 1], sizes = [8, 1], strides = [1, 1]} : vector<8x5xf32> to vector<8x1xf32>
    %8 = vector.broadcast %7 : vector<8x1xf32> to vector<8x239xf32>
    %9 = arith.mulf %6, %8 : vector<8x239xf32>
    %10 = arith.addf %5, %9 : vector<8x239xf32>
    %11 = vector.extract_strided_slice %0 {offsets = [0, 16], sizes = [8, 239], strides = [1, 1]} : vector<8x256xf32> to vector<8x239xf32>
    %12 = vector.extract_strided_slice %1 {offsets = [0, 2], sizes = [8, 1], strides = [1, 1]} : vector<8x5xf32> to vector<8x1xf32>
    %13 = vector.broadcast %12 : vector<8x1xf32> to vector<8x239xf32>
    %14 = arith.mulf %11, %13 : vector<8x239xf32>
    %15 = arith.addf %10, %14 : vector<8x239xf32>
    %16 = vector.extract_strided_slice %0 {offsets = [0, 17], sizes = [8, 239], strides = [1, 1]} : vector<8x256xf32> to vector<8x239xf32>
    %17 = vector.extract_strided_slice %1 {offsets = [0, 3], sizes = [8, 1], strides = [1, 1]} : vector<8x5xf32> to vector<8x1xf32>
    %18 = vector.broadcast %17 : vector<8x1xf32> to vector<8x239xf32>
    %19 = arith.mulf %16, %18 : vector<8x239xf32>
    %20 = arith.addf %15, %19 : vector<8x239xf32>
    %21 = vector.extract_strided_slice %1 {offsets = [0, 4], sizes = [8, 1], strides = [1, 1]} : vector<8x5xf32> to vector<8x1xf32>
    %22 = vector.broadcast %21 : vector<8x1xf32> to vector<8x239xf32>
    %23 = arith.addf %20, %22 : vector<8x239xf32>
    %cst = arith.constant 0.000000e+00 : f32
    %24 = vector.broadcast %cst : f32 to vector<8x239xf32>
    %25 = arith.maximumf %23, %24 : vector<8x239xf32>
    %c0_3 = arith.constant 0 : index
    %c0_4 = arith.constant 0 : index
    %26 = vector.load %arg3[%c0_3, %c0_4] : memref<8x5xf32, #tpu.memory_space<vmem>>, vector<8x5xf32>
    %27 = vector.extract_strided_slice %26 {offsets = [0, 0], sizes = [8, 4], strides = [1, 1]} : vector<8x5xf32> to vector<8x4xf32>
    %28 = vector.extract_strided_slice %26 {offsets = [0, 4], sizes = [8, 1], strides = [1, 1]} : vector<8x5xf32> to vector<8x1xf32>
    %29 = vector.extract_strided_slice %25 {offsets = [0, 0], sizes = [4, 239], strides = [1, 1]} : vector<8x239xf32> to vector<4x239xf32>
    %cst_5 = arith.constant dense<0.000000e+00> : vector<8x239xf32>
    %30 = tpu.matmul %27, %29, %cst_5 {dimension_numbers = #tpu.dot_dimension_numbers<[1], [0], [0], [1], [0, 0, 1, 1], [], []>} : vector<8x4xf32>, vector<4x239xf32>, vector<8x239xf32> -> vector<8x239xf32>
    %31 = vector.broadcast %28 : vector<8x1xf32> to vector<8x239xf32>
    %32 = arith.addf %30, %31 : vector<8x239xf32>
    %cst_6 = arith.constant 0.000000e+00 : f32
    %33 = vector.broadcast %cst_6 : f32 to vector<8x239xf32>
    %34 = arith.maximumf %32, %33 : vector<8x239xf32>
    %c0_7 = arith.constant 0 : index
    %c0_8 = arith.constant 0 : index
    %35 = vector.load %arg4[%c0_7, %c0_8] : memref<16x256xf32, #tpu.memory_space<vmem>>, vector<8x239xf32>
    tpu.vector_store %arg4[%c0_7, %c0_8], %34 {strides = array<i32>} : memref<16x256xf32, #tpu.memory_space<vmem>>, vector<8x239xf32>,
    %36 = vector.extract_strided_slice %25 {offsets = [4, 0], sizes = [4, 239], strides = [1, 1]} : vector<8x239xf32> to vector<4x239xf32>
    %cst_9 = arith.constant dense<0.000000e+00> : vector<8x239xf32>
    %37 = tpu.matmul %27, %36, %cst_9 {dimension_numbers = #tpu.dot_dimension_numbers<[1], [0], [0], [1], [0, 0, 1, 1], [], []>} : vector<8x4xf32>, vector<4x239xf32>, vector<8x239xf32> -> vector<8x239xf32>
    %38 = vector.broadcast %28 : vector<8x1xf32> to vector<8x239xf32>
    %39 = arith.addf %37, %38 : vector<8x239xf32>
    %cst_10 = arith.constant 0.000000e+00 : f32
    %40 = vector.broadcast %cst_10 : f32 to vector<8x239xf32>
    %41 = arith.maximumf %39, %40 : vector<8x239xf32>
    %c8 = arith.constant 8 : index
    %c0_11 = arith.constant 0 : index
    %42 = vector.load %arg4[%c8, %c0_11] : memref<16x256xf32, #tpu.memory_space<vmem>>, vector<8x239xf32>
    tpu.vector_store %arg4[%c8, %c0_11], %41 {strides = array<i32>} : memref<16x256xf32, #tpu.memory_space<vmem>>, vector<8x239xf32>,
    return
  }
  func.func @transform_0(%arg0: i32) -> (i32, i32) {
    %c0_i32 = arith.constant 0 : i32
    %c0_i32_0 = arith.constant 0 : i32
    return %arg0, %c0_i32 : i32, i32
  }
  func.func @transform_1(%arg0: i32) -> (i32, i32) {
    %c0_i32 = arith.constant 0 : i32
    %c0_i32_0 = arith.constant 0 : i32
    return %arg0, %c0_i32 : i32, i32
  }
  func.func @transform_2(%arg0: i32) -> (i32, i32) {
    %c0_i32 = arith.constant 0 : i32
    %c0_i32_0 = arith.constant 0 : i32
    %c0_i32_1 = arith.constant 0 : i32
    return %c0_i32, %c0_i32_0 : i32, i32
  }
  func.func @transform_3(%arg0: i32) -> (i32, i32) {
    %c0_i32 = arith.constant 0 : i32
    %c0_i32_0 = arith.constant 0 : i32
    return %arg0, %c0_i32 : i32, i32
  }
}

</mosaic_0001>

<llo_original>
// kernel: tpu_custom_call.1
$region0: #{tpu_custom_call.1}
  #allocation0 [shape = 'u32[]', space=smem, size = 0x4, offset = 0x4, fixed_abs, tag = 'smem constant byte address 0x4 - core index']
  #allocation1 [shape = 'u32[144,128]{1,0:T(1,128)}', space=vmem, size = 0x12000, scoped, tag = 'internal scratch']
  %s0 = inlined_call_operand.hbm [shape: f32[8,256], index: 0, kind: input, shape index: {}]
  %s1 = inlined_call_operand.hbm [shape: f32[8,5], index: 1, kind: input, shape index: {}]
  %s2 = inlined_call_operand.hbm [shape: f32[8,5], index: 2, kind: input, shape index: {}]
  %s3 = inlined_call_operand.hbm [shape: f32[16,256], index: 3, kind: output, shape index: {}]
  %s4 = sld [smem:[#allocation0]]
  $region34: #{tpu_custom_call.1} parent=0
    _
  %s6 = ssub.s32 1, %s4
  %s7 = scalar_select 0, %s6, %s4
  $region1: #{tpu_custom_call.1} parent=0
    #allocation2 [shape = 'u8[8192]{0}', space=vmem, size = 0x2000, scoped, tag = 'input window, operand 0, single buffered']
    #allocation3 [shape = 's32[1]{0}', space=sflag, size = 0x4, scoped, tag = 'scoped memory for tpu_custom_call.1']
    #allocation4 [shape = 's32[1]{0}', space=sflag, size = 0x4, scoped, tag = 'scoped memory for tpu_custom_call.1']
    #allocation5 [shape = 'u8[4096]{0}', space=vmem, size = 0x1000, scoped, tag = 'input window, operand 1, single buffered']
    #allocation6 [shape = 's32[1]{0}', space=sflag, size = 0x4, scoped, tag = 'scoped memory for tpu_custom_call.1']
    #allocation7 [shape = 'u8[4096]{0}', space=vmem, size = 0x1000, scoped, tag = 'input window, operand 2, single buffered']
    #allocation8 [shape = 'u8[16384]{0}', space=vmem, size = 0x4000, scoped, tag = 'output window, operand 0, single buffered']
    %8 = vsyncpa [#allocation3], 0
    %9 = vsyncpa [#allocation6], 0
    %10 = vsyncpa [#allocation4], 0
    // Predicated region
    $region2: #{tpu_custom_call.1} parent=1 // pred_check
      _
    $region3: #{tpu_custom_call.1} parent=1 // pred_check_branch
      %12 = sbr.rel (0) target = $region5
    $region4: #{tpu_custom_call.1} parent=1 // pred_region
      %s14 = ssub.s32 256, 256
      %15 = vsyncadd [#allocation3], %s14
      %s17 = sshll.u32 [#allocation2], 4
      %s18 = int_to_ptr.vmem [resolvable:$true] %s17
      %20 = dma.hbm_to_vmem [thread:$0]  %s0, 256, %s18, [#allocation3]
    $region5: #{tpu_custom_call.1} parent=1 // pred_fallthru
      _
    // Predicated region
    $region6: #{tpu_custom_call.1} parent=1 // pred_check
      _
    $region7: #{tpu_custom_call.1} parent=1 // pred_check_branch
      %22 = sbr.rel (0) target = $region9
    $region8: #{tpu_custom_call.1} parent=1 // pred_region
      %s24 = ssub.s32 128, 128
      %25 = vsyncadd [#allocation6], %s24
      %s27 = sshll.u32 [#allocation5], 4
      %s28 = int_to_ptr.vmem [resolvable:$true] %s27
      %30 = dma.hbm_to_vmem [thread:$0]  %s1, 128, %s28, [#allocation6]
    $region9: #{tpu_custom_call.1} parent=1 // pred_fallthru
      _
    // Predicated region
    $region10: #{tpu_custom_call.1} parent=1 // pred_check
      _
    $region11: #{tpu_custom_call.1} parent=1 // pred_check_branch
      %32 = sbr.rel (0) target = $region13
    $region12: #{tpu_custom_call.1} parent=1 // pred_region
      %s34 = ssub.s32 128, 128
      %35 = vsyncadd [#allocation6], %s34
      %s37 = sshll.u32 [#allocation7], 4
      %s38 = int_to_ptr.vmem [resolvable:$true] %s37
      %40 = dma.hbm_to_vmem [thread:$0]  %s2, 128, %s38, [#allocation6]
    $region13: #{tpu_custom_call.1} parent=1 // pred_fallthru
      _
    // Predicated region
    $region14: #{tpu_custom_call.1} parent=1 // pred_check
      _
    $region15: #{tpu_custom_call.1} parent=1 // pred_check_branch
      %42 = sbr.rel (0) target = $region17
    $region16: #{tpu_custom_call.1} parent=1 // pred_region
      %43 = dma.done [#allocation3], 256
    $region17: #{tpu_custom_call.1} parent=1 // pred_fallthru
      _
    // Predicated region
    $region18: #{tpu_custom_call.1} parent=1 // pred_check
      _
    $region19: #{tpu_custom_call.1} parent=1 // pred_check_branch
      %45 = sbr.rel (0) target = $region21
    $region20: #{tpu_custom_call.1} parent=1 // pred_region
      %46 = dma.done [#allocation6], 128
    $region21: #{tpu_custom_call.1} parent=1 // pred_fallthru
      _
    // Predicated region
    $region22: #{tpu_custom_call.1} parent=1 // pred_check
      _
    $region23: #{tpu_custom_call.1} parent=1 // pred_check_branch
      %48 = sbr.rel (0) target = $region25
    $region24: #{tpu_custom_call.1} parent=1 // pred_region
      %49 = dma.done [#allocation6], 128
    $region25: #{tpu_custom_call.1} parent=1 // pred_fallthru
      _
    %v50 = vld [vmem:[#allocation2] sm:$0xff]
    %v51 = vld [vmem:[#allocation2 + $0x8] sm:$0xff]
    %v52 = vld [vmem:[#allocation5] sm:$0xff]
    %54 = vset.pattern.permute.xlu0 0
    %55 = vperm.xlu0 %54, %v52
    %v56 = vpop.permute.xlu0 %55
    %v58 = vmul.f32 %v50, %v56
    %v59 = vmul.f32 %v51, %v56
    %60 = vset.pattern.permute.xlu0 1
    %61 = vperm.xlu0 %60, %v52
    %v62 = vpop.permute.xlu0 %61
    %v64 = vmul.f32 %v50, %v62
    %v65 = vmul.f32 %v51, %v62
    %68 = vrot.lane.b32.xlu0 %v64, 127
    %v69 = vpop.permute.xlu0 %68
    %70 = vrot.lane.b32.xlu0 %v65, 127
    %v71 = vpop.permute.xlu0 %70
    %vm72 = vcmask 1039360
    %v73 = vsel %vm72, %v69, %v71
    %v76 = vadd.f32 %v58, %v73
    %v77 = vadd.f32 %v59, %v71
    %78 = vset.pattern.permute.xlu0 2
    %79 = vperm.xlu0 %78, %v52
    %v80 = vpop.permute.xlu0 %79
    %v82 = vmul.f32 %v50, %v80
    %v83 = vmul.f32 %v51, %v80
    %86 = vrot.lane.b32.xlu0 %v82, 112
    %v87 = vpop.permute.xlu0 %86
    %88 = vrot.lane.b32.xlu0 %v83, 112
    %v89 = vpop.permute.xlu0 %88
    %vm90 = vcmask 916480
    %v91 = vsel %vm90, %v87, %v89
    %v94 = vadd.f32 %v76, %v91
    %v95 = vadd.f32 %v77, %v89
    %96 = vset.pattern.permute.xlu0 3
    %97 = vperm.xlu0 %96, %v52
    %v98 = vpop.permute.xlu0 %97
    %v100 = vmul.f32 %v50, %v98
    %v101 = vmul.f32 %v51, %v98
    %104 = vrot.lane.b32.xlu0 %v100, 111
    %v105 = vpop.permute.xlu0 %104
    %106 = vrot.lane.b32.xlu0 %v101, 111
    %v107 = vpop.permute.xlu0 %106
    %vm108 = vcmask 908288
    %v109 = vsel %vm108, %v105, %v107
    %v112 = vadd.f32 %v94, %v109
    %v113 = vadd.f32 %v95, %v107
    %114 = vset.pattern.permute.xlu0 4
    %115 = vperm.xlu0 %114, %v52
    %v116 = vpop.permute.xlu0 %115
    %v118 = vadd.f32 %v112, %v116
    %v119 = vadd.f32 %v113, %v116
    %v120 = vmax.f32 %v118, 0.0
    %v121 = vmax.f32 %v119, 0.0
    %v122 = vld [vmem:[#allocation7] sm:$0xff]
    %124 = vset.pattern.permute.xlu0 4
    %125 = vperm.xlu0 %124, %v122
    %v126 = vpop.permute.xlu0 %125
    %vm128 = vcmask 31744
    %v129 = vsel %vm128, %v122, 0
    %vm131 = vcmask 1043456
    %v133 = vsel %vm131, %v120, 0
    %v136 = vsel %vm131, %v121, 0
    %138 = vmatprep.subr.mxu0 %v136
    %139 = vmatpush1.msra.mxu0 %v133
    %140 = vmatprep.subr.mxu0 0.0
    %141 = vmatpush1.msra.mxu0 0.0
    %142 = vmatprep.subr.mxu0 0.0
    %143 = vmatpush1.msra.mxu0 0.0
    %144 = vmatprep.subr.mxu0 0.0
    %145 = vmatpush1.msra.mxu0 0.0
    %146 = vmatprep.subr.mxu0 0.0
    %147 = vmatpush1.msra.mxu0 0.0
    %148 = vmatprep.subr.mxu0 0.0
    %149 = vmatpush1.msra.mxu0 0.0
    %150 = vmatprep.subr.mxu0 0.0
    %151 = vmatpush1.msra.mxu0 0.0
    %152 = vmatprep.subr.mxu0 0.0
    %153 = vmatpush1.msra.mxu0 0.0
    %154 = vmatprep.subr.mxu0 0.0
    %155 = vmatpush1.msra.mxu0 0.0
    %156 = vmatprep.subr.mxu0 0.0
    %157 = vmatpush1.msra.mxu0 0.0
    %158 = vmatprep.subr.mxu0 0.0
    %159 = vmatpush1.msra.mxu0 0.0
    %160 = vmatprep.subr.mxu0 0.0
    %161 = vmatpush1.msra.mxu0 0.0
    %162 = vmatprep.subr.mxu0 0.0
    %163 = vmatpush1.msra.mxu0 0.0
    %164 = vmatprep.subr.mxu0 0.0
    %165 = vmatpush1.msra.mxu0 0.0
    %166 = vmatprep.subr.mxu0 0.0
    %167 = vmatpush1.msra.mxu0 0.0
    %168 = vmatprep.subr.mxu0 0.0
    %169 = vmatpush1.msra.mxu0 0.0
    %170 = vmatprep.subr.mxu0 0.0
    %171 = vmatpush1.msra.mxu0 0.0
    %172 = vmatprep.subr.mxu0 0.0
    %173 = vmatpush1.msra.mxu0 0.0
    %174 = vmatprep.subr.mxu0 0.0
    %175 = vmatpush1.msra.mxu0 0.0
    %176 = vmatprep.subr.mxu0 0.0
    %177 = vmatpush1.msra.mxu0 0.0
    %178 = vmatprep.subr.mxu0 0.0
    %179 = vmatpush1.msra.mxu0 0.0
    %180 = vmatprep.subr.mxu0 0.0
    %181 = vmatpush1.msra.mxu0 0.0
    %182 = vmatprep.subr.mxu0 0.0
    %183 = vmatpush1.msra.mxu0 0.0
    %184 = vmatprep.subr.mxu0 0.0
    %185 = vmatpush1.msra.mxu0 0.0
    %186 = vmatprep.subr.mxu0 0.0
    %187 = vmatpush1.msra.mxu0 0.0
    %188 = vmatprep.subr.mxu0 0.0
    %189 = vmatpush1.msra.mxu0 0.0
    %190 = vmatprep.subr.mxu0 0.0
    %191 = vmatpush1.msra.mxu0 0.0
    %192 = vmatprep.subr.mxu0 0.0
    %193 = vmatpush1.msra.mxu0 0.0
    %194 = vmatprep.subr.mxu0 0.0
    %195 = vmatpush1.msra.mxu0 0.0
    %196 = vmatprep.subr.mxu0 0.0
    %197 = vmatpush1.msra.mxu0 0.0
    %198 = vmatprep.subr.mxu0 0.0
    %199 = vmatpush1.msra.mxu0 0.0
    %200 = vmatprep.subr.mxu0 0.0
    %201 = vmatpush1.msra.mxu0 0.0
    %202 = vmatprep.mubr.f32.mxu0 0.0
    %203 = vmatmul.mubr.f32.gmra.mrb[0].mxu0 %v129
    %v204 = vpop.f32.mrb[0].mxu0
    %v205 = vadd.f32 %v126, %v204
    %v206 = vpop.f32.mrb[0].mxu0
    %v207 = vadd.f32 %v126, %v206
    %208 = vdwg.mxu0
    %v209 = vmax.f32 %v205, 0.0
    %v210 = vmax.f32 %v207, 0.0
    %211 = vst [vmem:[#allocation8] sm:$0xff] %v209
    %212 = vst.msk [vmem:[#allocation8 + $0x8] sm:$0xff] %vm108, %v210
    %v213 = vrot.slane %v120, 4
    %v214 = vrot.slane %v121, 4
    %v215 = vsel %vm131, %v213, 0
    %v217 = vsel %vm131, %v214, 0
    %219 = vmatprep.subr.mxu0 %v217
    %220 = vmatpush1.msra.mxu0 %v215
    %221 = vmatprep.subr.mxu0 0.0
    %222 = vmatpush1.msra.mxu0 0.0
    %223 = vmatprep.subr.mxu0 0.0
    %224 = vmatpush1.msra.mxu0 0.0
    %225 = vmatprep.subr.mxu0 0.0
    %226 = vmatpush1.msra.mxu0 0.0
    %227 = vmatprep.subr.mxu0 0.0
    %228 = vmatpush1.msra.mxu0 0.0
    %229 = vmatprep.subr.mxu0 0.0
    %230 = vmatpush1.msra.mxu0 0.0
    %231 = vmatprep.subr.mxu0 0.0
    %232 = vmatpush1.msra.mxu0 0.0
    %233 = vmatprep.subr.mxu0 0.0
    %234 = vmatpush1.msra.mxu0 0.0
    %235 = vmatprep.subr.mxu0 0.0
    %236 = vmatpush1.msra.mxu0 0.0
    %237 = vmatprep.subr.mxu0 0.0
    %238 = vmatpush1.msra.mxu0 0.0
    %239 = vmatprep.subr.mxu0 0.0
    %240 = vmatpush1.msra.mxu0 0.0
    %241 = vmatprep.subr.mxu0 0.0
    %242 = vmatpush1.msra.mxu0 0.0
    %243 = vmatprep.subr.mxu0 0.0
    %244 = vmatpush1.msra.mxu0 0.0
    %245 = vmatprep.subr.mxu0 0.0
    %246 = vmatpush1.msra.mxu0 0.0
    %247 = vmatprep.subr.mxu0 0.0
    %248 = vmatpush1.msra.mxu0 0.0
    %249 = vmatprep.subr.mxu0 0.0
    %250 = vmatpush1.msra.mxu0 0.0
    %251 = vmatprep.subr.mxu0 0.0
    %252 = vmatpush1.msra.mxu0 0.0
    %253 = vmatprep.subr.mxu0 0.0
    %254 = vmatpush1.msra.mxu0 0.0
    %255 = vmatprep.subr.mxu0 0.0
    %256 = vmatpush1.msra.mxu0 0.0
    %257 = vmatprep.subr.mxu0 0.0
    %258 = vmatpush1.msra.mxu0 0.0
    %259 = vmatprep.subr.mxu0 0.0
    %260 = vmatpush1.msra.mxu0 0.0
    %261 = vmatprep.subr.mxu0 0.0
    %262 = vmatpush1.msra.mxu0 0.0
    %263 = vmatprep.subr.mxu0 0.0
    %264 = vmatpush1.msra.mxu0 0.0
    %265 = vmatprep.subr.mxu0 0.0
    %266 = vmatpush1.msra.mxu0 0.0
    %267 = vmatprep.subr.mxu0 0.0
    %268 = vmatpush1.msra.mxu0 0.0
    %269 = vmatprep.subr.mxu0 0.0
    %270 = vmatpush1.msra.mxu0 0.0
    %271 = vmatprep.subr.mxu0 0.0
    %272 = vmatpush1.msra.mxu0 0.0
    %273 = vmatprep.subr.mxu0 0.0
    %274 = vmatpush1.msra.mxu0 0.0
    %275 = vmatprep.subr.mxu0 0.0
    %276 = vmatpush1.msra.mxu0 0.0
    %277 = vmatprep.subr.mxu0 0.0
    %278 = vmatpush1.msra.mxu0 0.0
    %279 = vmatprep.subr.mxu0 0.0
    %280 = vmatpush1.msra.mxu0 0.0
    %281 = vmatprep.subr.mxu0 0.0
    %282 = vmatpush1.msra.mxu0 0.0
    %283 = vmatprep.mubr.f32.mxu0 0.0
    %284 = vmatmul.mubr.f32.gmra.mrb[0].mxu0 %v129
    %v285 = vpop.f32.mrb[0].mxu0
    %v286 = vadd.f32 %v126, %v285
    %v287 = vpop.f32.mrb[0].mxu0
    %v288 = vadd.f32 %v126, %v287
    %289 = vdwg.mxu0
    %v290 = vmax.f32 %v286, 0.0
    %v291 = vmax.f32 %v288, 0.0
    %292 = vst [vmem:[#allocation8 + $0x10] sm:$0xff] %v290
    %293 = vst.msk [vmem:[#allocation8 + $0x18] sm:$0xff] %vm108, %v291
    // Predicated region
    $region26: #{tpu_custom_call.1} parent=1 // pred_check
      _
    $region27: #{tpu_custom_call.1} parent=1 // pred_check_branch
      %295 = sbr.rel (0) target = $region29
    $region28: #{tpu_custom_call.1} parent=1 // pred_region
      %s297 = ssub.s32 512, 512
      %298 = vsyncadd [#allocation4], %s297
      %s299 = sshll.u32 [#allocation8], 4
      %s300 = int_to_ptr.vmem [resolvable:$true] %s299
      %305 = dma.vmem_to_hbm [thread:$0]  %s300, 512, %s3, [#allocation4], 256, 256, 16
    $region29: #{tpu_custom_call.1} parent=1 // pred_fallthru
      _
    // Predicated region
    $region30: #{tpu_custom_call.1} parent=1 // pred_check
      _
    $region31: #{tpu_custom_call.1} parent=1 // pred_check_branch
      %307 = sbr.rel (0) target = $region33
    $region32: #{tpu_custom_call.1} parent=1 // pred_region
      %308 = dma.done [#allocation4], 512
    $region33: #{tpu_custom_call.1} parent=1 // pred_fallthru
      _
    %309 = vsyncpa [#allocation3], 1
    %310 = vsyncpa [#allocation6], 1
    %311 = vsyncpa [#allocation4], 1

</llo_original>
